<compile_context>
chip_gen: v6e
topology: v6e:2x2x1
jax: 0.10.0
libtpu: 0.0.40
codegen_flags: <defaults>
</compile_context>

<pallas_src>
import numpy as np
import jax
import jax.numpy as jnp
from jax.experimental import pallas as pl
from jax.experimental.pallas import tpu as pltpu

EPS = 1e-5


# ----------------------------------------------------------------------------------------
# Wrapper-side constant construction (layout plumbing; runs in numpy/XLA outside the kernel)
# ----------------------------------------------------------------------------------------
def _banded_conv_weight(w_hwio, width):
    """(3,3,Ci,Co) -> (3*width*Ci, width*Co) K-fused block-Toeplitz weight.

    Row block dh in {0,1,2} multiplies the activation row h+dh-1; within a block,
    M[dh, wi*Ci+ci, w*Co+co] = w_hwio[dh, wi-w+1, ci, co] when 0 <= wi-w+1 < 3, else 0,
    so 'same' zero padding along W is implicit (out-of-range taps are simply absent).
    """
    kh, kw, ci, co = w_hwio.shape
    sel = np.zeros((kw, width, width), np.float32)          # sel[dw, wi, w]
    for dw in range(kw):
        for w in range(width):
            wi = w + dw - 1
            if 0 <= wi < width:
                sel[dw, wi, w] = 1.0
    m = jnp.einsum('hdio,dnm->hnimo', w_hwio.astype(jnp.float32), jnp.asarray(sel))
    return m.reshape(kh * width * ci, width * co)


# ----------------------------------------------------------------------------------------
# Kernel + wrapper
# ----------------------------------------------------------------------------------------
def conv_block(x_nchw, w1_oihw, g1, b1, w2_oihw, g2, b2, *, matmul_dtype=jnp.bfloat16):
    """PyTorch-convention I/O: x (N,Cin,H,W), weights (Cout,Cin,3,3) -> (N,Cout,H,W)."""
    n, cin, h, w = x_nchw.shape
    cmid = w1_oihw.shape[0]
    cout = w2_oihw.shape[0]
    f32 = jnp.float32
    nh = n * h
    inv_count = 1.0 / float(n * h * w)

    # NCHW -> lane-dense (N*H, W*Cin) rows (channel fastest within the lane dimension).
    x2d = jnp.transpose(x_nchw, (0, 2, 3, 1)).reshape(nh, w * cin).astype(f32)

    # OIHW -> HWIO -> K-fused banded weights, pre-cast to the MXU operand dtype.
    m1 = _banded_conv_weight(jnp.transpose(w1_oihw, (2, 3, 1, 0)), w).astype(matmul_dtype)
    m2 = _banded_conv_weight(jnp.transpose(w2_oihw, (2, 3, 1, 0)), w).astype(matmul_dtype)

    # Gamma/beta pre-broadcast to the (w, c)-interleaved lane layout (channel = lane % C).
    g1b = jnp.tile(g1.astype(f32).reshape(1, cmid), (1, w))
    b1b = jnp.tile(b1.astype(f32).reshape(1, cmid), (1, w))
    g2b = jnp.tile(g2.astype(f32).reshape(1, cout), (1, w))
    b2b = jnp.tile(b2.astype(f32).reshape(1, cout), (1, w))

    dims = (((1,), (0,)), ((), ()))   # contract cat lanes with weight rows

    def kernel(x_ref, m1_ref, m2_ref, g1_ref, b1_ref, g2_ref, b2_ref, o_ref):
        # Boundary masks along the stacked N*H row axis (built in-kernel from an iota):
        # mask_up zeroes rows with h==0 (no row above), mask_dn rows with h==H-1.
        row = jax.lax.broadcasted_iota(jnp.int32, (nh, 1), 0)
        mask_up = (row % h != 0).astype(f32)
        mask_dn = (row % h != h - 1).astype(f32)

        def conv3x3(inp, m_ref):
            # inp: (N*H, W*Ci) f32.  Single MXU matmul: K-concat of the 3 dh taps.
            up = pltpu.roll(inp, shift=1, axis=0) * mask_up        # row h-1 (0 at h==0)
            dn = pltpu.roll(inp, shift=nh - 1, axis=0) * mask_dn   # row h+1 (0 at h==H-1)
            mw = m_ref[...]
            cat = jnp.concatenate([up, inp, dn], axis=1).astype(mw.dtype)
            return jax.lax.dot_general(cat, mw, dims, preferred_element_type=f32)

        def lane_channel_sum(v, c):
            # v: (r, W*C) with (w, c)-interleaved lanes.  Circular strided roll-and-add
            # (XLU + VPU): every lane ends up holding the sum over all W positions of its
            # channel (lane % c), i.e. the per-channel sum already broadcast back.
            wc = v.shape[1]
            width = wc // c
            if width & (width - 1) == 0:               # log2(W) doubling steps
                shift = c
                while shift < wc:
                    v = v + pltpu.roll(v, shift=shift, axis=1)
                    shift *= 2
                return v
            acc = v                                     # generic fallback: W-1 rolls
            for k in range(1, width):
                acc = acc + pltpu.roll(v, shift=k * c, axis=1)
            return acc

        def bn_relu(acc, g_ref, b_ref, c):
            # Single-pass batch statistics: sublane row-sums first, then the lane channel
            # reduction -- no MXU projector matmuls.  All statistics math in f32.
            s1 = jnp.sum(acc, axis=0, keepdims=True)            # (1, W*C)
            s2 = jnp.sum(acc * acc, axis=0, keepdims=True)      # (1, W*C)
            stats = lane_channel_sum(jnp.concatenate([s1, s2], axis=0), c) * inv_count
            mean = stats[0:1, :]
            var = jnp.maximum(stats[1:2, :] - mean * mean, 0.0)
            scale = g_ref[...] * jax.lax.rsqrt(var + EPS)       # folded affine
            shift = b_ref[...] - mean * scale
            return jnp.maximum(acc * scale + shift, 0.0)

        y1 = bn_relu(conv3x3(x_ref[...], m1_ref), g1_ref, b1_ref, cmid)   # (N*H, W*Cmid)
        o_ref[...] = bn_relu(conv3x3(y1, m2_ref), g2_ref, b2_ref, cout)   # (N*H, W*Cout)

    out2d = pl.pallas_call(
        kernel,
        out_shape=jax.ShapeDtypeStruct((nh, w * cout), f32),
        in_specs=[pl.BlockSpec(memory_space=pltpu.MemorySpace.VMEM)] * 7,
        out_specs=pl.BlockSpec(memory_space=pltpu.MemorySpace.VMEM),
    )(x2d, m1, m2, g1b, b1b, g2b, b2b)

    return jnp.transpose(out2d.reshape(n, h, w, cout), (0, 3, 1, 2))   # back to NCHW


# ----------------------------------------------------------------------------------------
# Pure-JAX reference (PyTorch training-mode forward) and self-check
# ----------------------------------------------------------------------------------------
def reference(x_nchw, w1, g1, b1, w2, g2, b2):
    def conv(x, wt):
        return jax.lax.conv_general_dilated(
            x, wt, (1, 1), ((1, 1), (1, 1)),
            dimension_numbers=('NCHW', 'OIHW', 'NCHW'))

    def bn_relu(x, g, b):
        m = jnp.mean(x, axis=(0, 2, 3), keepdims=True)
        v = jnp.mean((x - m) ** 2, axis=(0, 2, 3), keepdims=True)
        y = (x - m) * jax.lax.rsqrt(v + EPS)
        y = y * g.reshape(1, -1, 1, 1) + b.reshape(1, -1, 1, 1)
        return jnp.maximum(y, 0.0)

    y = bn_relu(conv(x_nchw, w1), g1, b1)
    return bn_relu(conv(y, w2), g2, b2)


if __name__ == "__main__":
    N, Cin, Cmid, Cout, H, W = 2, 4, 8, 8, 16, 16

    key = jax.random.PRNGKey(0)
    k = jax.random.split(key, 7)
    x = jax.random.normal(k[0], (N, Cin, H, W), jnp.float32)
    w1 = jax.random.normal(k[1], (Cmid, Cin, 3, 3), jnp.float32) * 0.2
    w2 = jax.random.normal(k[2], (Cout, Cmid, 3, 3), jnp.float32) * 0.2
    g1 = 1.0 + 0.1 * jax.random.normal(k[3], (Cmid,), jnp.float32)
    b1 = 0.1 * jax.random.normal(k[4], (Cmid,), jnp.float32)
    g2 = 1.0 + 0.1 * jax.random.normal(k[5], (Cout,), jnp.float32)
    b2 = 0.1 * jax.random.normal(k[6], (Cout,), jnp.float32)

    ref = reference(x, w1, g1, b1, w2, g2, b2)

    # f32-operand run: validates the restructuring (rolls + masks, K-fused taps, roll-reduced
    # BN statistics) exactly against the PyTorch-semantics reference.
    out_f32 = jax.block_until_ready(
        conv_block(x, w1, g1, b1, w2, g2, b2, matmul_dtype=jnp.float32))
    assert out_f32.shape == (N, Cout, H, W)
    assert jnp.allclose(out_f32, ref, atol=2e-3, rtol=2e-3), \
        f"f32 max abs diff {jnp.max(jnp.abs(out_f32 - ref))}"

    # bf16-operand run (production path): MXU operands in bf16, f32 accumulation and BN math.
    # bf16 operand rounding (~2^-8 relative per layer) bounds the deviation from the f32
    # reference; tolerance set accordingly.
    out = jax.block_until_ready(
        conv_block(x, w1, g1, b1, w2, g2, b2, matmul_dtype=jnp.bfloat16))
    assert out.shape == (N, Cout, H, W)
    assert jnp.allclose(out, ref, atol=1e-1, rtol=1e-1), \
        f"bf16 max abs diff {jnp.max(jnp.abs(out - ref))}"

    print("KERNEL_OK")
</pallas_src>

<mosaic_0001>
module attributes {stable_mosaic.version = 11 : i64} {
  func.func @kernel(%arg0: memref<32x64xf32, #tpu.memory_space<vmem>>, %arg1: memref<192x128xf32, #tpu.memory_space<vmem>>, %arg2: memref<384x128xf32, #tpu.memory_space<vmem>>, %arg3: memref<1x128xf32, #tpu.memory_space<vmem>>, %arg4: memref<1x128xf32, #tpu.memory_space<vmem>>, %arg5: memref<1x128xf32, #tpu.memory_space<vmem>>, %arg6: memref<1x128xf32, #tpu.memory_space<vmem>>, %arg7: memref<32x128xf32, #tpu.memory_space<vmem>>) attributes {dimension_semantics = [], scalar_prefetch = 0 : i64, scratch_operands = 0 : i64, tpu.core_type = #tpu.core_type<tc>} {
    %0 = tpu.iota {dimensions = array<i32: 0>} : vector<32x1xi32>
    %c16_i32 = arith.constant 16 : i32
    %c0_i32 = arith.constant 0 : i32
    %1 = arith.cmpi eq, %c16_i32, %c0_i32 : i32
    %c1_i32 = arith.constant 1 : i32
    %2 = arith.select %1, %c1_i32, %c16_i32 : i32
    %3 = vector.broadcast %2 : i32 to vector<32x1xi32>
    %4 = arith.remsi %0, %3 : vector<32x1xi32>
    %c0_i32_0 = arith.constant 0 : i32
    %5 = vector.broadcast %c0_i32_0 : i32 to vector<32x1xi32>
    %6 = arith.cmpi ne, %4, %5 : vector<32x1xi32>
    %c0_i32_1 = arith.constant 0 : i32
    %7 = vector.broadcast %c0_i32_1 : i32 to vector<32x1xi32>
    %8 = arith.cmpi slt, %4, %7 : vector<32x1xi32>
    %c0_i32_2 = arith.constant 0 : i32
    %9 = arith.cmpi slt, %2, %c0_i32_2 : i32
    %10 = vector.broadcast %9 : i1 to vector<32x1xi1>
    %11 = vector.broadcast %10 : vector<32x1xi1> to vector<32x1xi1>
    %12 = arith.xori %8, %11 : vector<32x1xi1>
    %13 = arith.andi %12, %6 : vector<32x1xi1>
    %14 = vector.broadcast %2 : i32 to vector<32x1xi32>
    %15 = arith.addi %4, %14 : vector<32x1xi32>
    %16 = arith.select %13, %15, %4 : vector<32x1xi1>, vector<32x1xi32>
    %c0_i32_3 = arith.constant 0 : i32
    %17 = vector.broadcast %c0_i32_3 : i32 to vector<32x1xi32>
    %18 = arith.cmpi ne, %16, %17 : vector<32x1xi32>
    %19 = arith.extui %18 : vector<32x1xi1> to vector<32x1xi32>
    %20 = arith.sitofp %19 : vector<32x1xi32> to vector<32x1xf32>
    %c16_i32_4 = arith.constant 16 : i32
    %c0_i32_5 = arith.constant 0 : i32
    %21 = arith.cmpi eq, %c16_i32_4, %c0_i32_5 : i32
    %c1_i32_6 = arith.constant 1 : i32
    %22 = arith.select %21, %c1_i32_6, %c16_i32_4 : i32
    %23 = vector.broadcast %22 : i32 to vector<32x1xi32>
    %24 = arith.remsi %0, %23 : vector<32x1xi32>
    %c0_i32_7 = arith.constant 0 : i32
    %25 = vector.broadcast %c0_i32_7 : i32 to vector<32x1xi32>
    %26 = arith.cmpi ne, %24, %25 : vector<32x1xi32>
    %c0_i32_8 = arith.constant 0 : i32
    %27 = vector.broadcast %c0_i32_8 : i32 to vector<32x1xi32>
    %28 = arith.cmpi slt, %24, %27 : vector<32x1xi32>
    %c0_i32_9 = arith.constant 0 : i32
    %29 = arith.cmpi slt, %22, %c0_i32_9 : i32
    %30 = vector.broadcast %29 : i1 to vector<32x1xi1>
    %31 = vector.broadcast %30 : vector<32x1xi1> to vector<32x1xi1>
    %32 = arith.xori %28, %31 : vector<32x1xi1>
    %33 = arith.andi %32, %26 : vector<32x1xi1>
    %34 = vector.broadcast %22 : i32 to vector<32x1xi32>
    %35 = arith.addi %24, %34 : vector<32x1xi32>
    %36 = arith.select %33, %35, %24 : vector<32x1xi1>, vector<32x1xi32>
    %c15_i32 = arith.constant 15 : i32
    %37 = vector.broadcast %c15_i32 : i32 to vector<32x1xi32>
    %38 = arith.cmpi ne, %36, %37 : vector<32x1xi32>
    %39 = arith.extui %38 : vector<32x1xi1> to vector<32x1xi32>
    %40 = arith.sitofp %39 : vector<32x1xi32> to vector<32x1xf32>
    %c0 = arith.constant 0 : index
    %c0_10 = arith.constant 0 : index
    %41 = vector.load %arg0[%c0, %c0_10] : memref<32x64xf32, #tpu.memory_space<vmem>>, vector<32x64xf32>
    %c1_i32_11 = arith.constant 1 : i32
    %42 = tpu.dynamic_rotate %41 by %c1_i32_11 dim 0 : vector<32x64xf32>, i32 -> vector<32x64xf32>
    %43 = vector.broadcast %20 : vector<32x1xf32> to vector<32x64xf32>
    %44 = arith.mulf %42, %43 : vector<32x64xf32>
    %c31_i32 = arith.constant 31 : i32
    %45 = tpu.dynamic_rotate %41 by %c31_i32 dim 0 : vector<32x64xf32>, i32 -> vector<32x64xf32>
    %46 = vector.broadcast %40 : vector<32x1xf32> to vector<32x64xf32>
    %47 = arith.mulf %45, %46 : vector<32x64xf32>
    %c0_12 = arith.constant 0 : index
    %c0_13 = arith.constant 0 : index
    %48 = vector.load %arg1[%c0_12, %c0_13] : memref<192x128xf32, #tpu.memory_space<vmem>>, vector<192x128xf32>
    %49 = tpu.concatenate %44, %41, %47 in 1 : vector<32x64xf32>, vector<32x64xf32>, vector<32x64xf32> -> vector<32x192xf32>
    %cst = arith.constant dense<0.000000e+00> : vector<32x128xf32>
    %50 = tpu.matmul %49, %48, %cst {dimension_numbers = #tpu.dot_dimension_numbers<[1], [0], [0], [1], [0, 0, 1, 1], [], []>} : vector<32x192xf32>, vector<192x128xf32>, vector<32x128xf32> -> vector<32x128xf32>
    %cst_14 = arith.constant dense<0.000000e+00> : vector<128xf32>
    %51 = vector.multi_reduction <add>, %50, %cst_14 [0] : vector<32x128xf32> to vector<128xf32>
    %52 = vector.shape_cast %51 : vector<128xf32> to vector<1x128xf32>
    %53 = arith.mulf %50, %50 : vector<32x128xf32>
    %cst_15 = arith.constant dense<0.000000e+00> : vector<128xf32>
    %54 = vector.multi_reduction <add>, %53, %cst_15 [0] : vector<32x128xf32> to vector<128xf32>
    %55 = vector.shape_cast %54 : vector<128xf32> to vector<1x128xf32>
    %56 = tpu.concatenate %52, %55 in 0 : vector<1x128xf32>, vector<1x128xf32> -> vector<2x128xf32>
    %c8_i32 = arith.constant 8 : i32
    %57 = tpu.dynamic_rotate %56 by %c8_i32 dim 1 : vector<2x128xf32>, i32 -> vector<2x128xf32>
    %58 = arith.addf %56, %57 : vector<2x128xf32>
    %c16_i32_16 = arith.constant 16 : i32
    %59 = tpu.dynamic_rotate %58 by %c16_i32_16 dim 1 : vector<2x128xf32>, i32 -> vector<2x128xf32>
    %60 = arith.addf %58, %59 : vector<2x128xf32>
    %c32_i32 = arith.constant 32 : i32
    %61 = tpu.dynamic_rotate %60 by %c32_i32 dim 1 : vector<2x128xf32>, i32 -> vector<2x128xf32>
    %62 = arith.addf %60, %61 : vector<2x128xf32>
    %c64_i32 = arith.constant 64 : i32
    %63 = tpu.dynamic_rotate %62 by %c64_i32 dim 1 : vector<2x128xf32>, i32 -> vector<2x128xf32>
    %64 = arith.addf %62, %63 : vector<2x128xf32>
    %cst_17 = arith.constant 0.001953125 : f32
    %65 = vector.broadcast %cst_17 : f32 to vector<2x128xf32>
    %66 = arith.mulf %64, %65 : vector<2x128xf32>
    %67 = vector.extract_strided_slice %66 {offsets = [0, 0], sizes = [1, 128], strides = [1, 1]} : vector<2x128xf32> to vector<1x128xf32>
    %68 = vector.extract_strided_slice %66 {offsets = [1, 0], sizes = [1, 128], strides = [1, 1]} : vector<2x128xf32> to vector<1x128xf32>
    %69 = arith.mulf %67, %67 : vector<1x128xf32>
    %70 = arith.subf %68, %69 : vector<1x128xf32>
    %cst_18 = arith.constant 0.000000e+00 : f32
    %71 = vector.broadcast %cst_18 : f32 to vector<1x128xf32>
    %72 = arith.maximumf %70, %71 : vector<1x128xf32>
    %c0_19 = arith.constant 0 : index
    %c0_20 = arith.constant 0 : index
    %73 = vector.load %arg3[%c0_19, %c0_20] : memref<1x128xf32, #tpu.memory_space<vmem>>, vector<1x128xf32>
    %cst_21 = arith.constant 9.99999974E-6 : f32
    %74 = vector.broadcast %cst_21 : f32 to vector<1x128xf32>
    %75 = arith.addf %72, %74 : vector<1x128xf32>
    %76 = math.rsqrt %75 : vector<1x128xf32>
    %77 = arith.mulf %73, %76 : vector<1x128xf32>
    %c0_22 = arith.constant 0 : index
    %c0_23 = arith.constant 0 : index
    %78 = vector.load %arg4[%c0_22, %c0_23] : memref<1x128xf32, #tpu.memory_space<vmem>>, vector<1x128xf32>
    %79 = arith.mulf %67, %77 : vector<1x128xf32>
    %80 = arith.subf %78, %79 : vector<1x128xf32>
    %81 = vector.broadcast %77 : vector<1x128xf32> to vector<32x128xf32>
    %82 = arith.mulf %50, %81 : vector<32x128xf32>
    %83 = vector.broadcast %80 : vector<1x128xf32> to vector<32x128xf32>
    %84 = arith.addf %82, %83 : vector<32x128xf32>
    %cst_24 = arith.constant 0.000000e+00 : f32
    %85 = vector.broadcast %cst_24 : f32 to vector<32x128xf32>
    %86 = arith.maximumf %84, %85 : vector<32x128xf32>
    %c1_i32_25 = arith.constant 1 : i32
    %87 = tpu.dynamic_rotate %86 by %c1_i32_25 dim 0 : vector<32x128xf32>, i32 -> vector<32x128xf32>
    %88 = vector.broadcast %20 : vector<32x1xf32> to vector<32x128xf32>
    %89 = arith.mulf %87, %88 : vector<32x128xf32>
    %c31_i32_26 = arith.constant 31 : i32
    %90 = tpu.dynamic_rotate %86 by %c31_i32_26 dim 0 : vector<32x128xf32>, i32 -> vector<32x128xf32>
    %91 = vector.broadcast %40 : vector<32x1xf32> to vector<32x128xf32>
    %92 = arith.mulf %90, %91 : vector<32x128xf32>
    %c0_27 = arith.constant 0 : index
    %c0_28 = arith.constant 0 : index
    %93 = vector.load %arg2[%c0_27, %c0_28] : memref<384x128xf32, #tpu.memory_space<vmem>>, vector<384x128xf32>
    %94 = tpu.concatenate %89, %86, %92 in 1 : vector<32x128xf32>, vector<32x128xf32>, vector<32x128xf32> -> vector<32x384xf32>
    %cst_29 = arith.constant dense<0.000000e+00> : vector<32x128xf32>
    %95 = tpu.matmul %94, %93, %cst_29 {dimension_numbers = #tpu.dot_dimension_numbers<[1], [0], [0], [1], [0, 0, 1, 1], [], []>} : vector<32x384xf32>, vector<384x128xf32>, vector<32x128xf32> -> vector<32x128xf32>
    %cst_30 = arith.constant dense<0.000000e+00> : vector<128xf32>
    %96 = vector.multi_reduction <add>, %95, %cst_30 [0] : vector<32x128xf32> to vector<128xf32>
    %97 = vector.shape_cast %96 : vector<128xf32> to vector<1x128xf32>
    %98 = arith.mulf %95, %95 : vector<32x128xf32>
    %cst_31 = arith.constant dense<0.000000e+00> : vector<128xf32>
    %99 = vector.multi_reduction <add>, %98, %cst_31 [0] : vector<32x128xf32> to vector<128xf32>
    %100 = vector.shape_cast %99 : vector<128xf32> to vector<1x128xf32>
    %101 = tpu.concatenate %97, %100 in 0 : vector<1x128xf32>, vector<1x128xf32> -> vector<2x128xf32>
    %c8_i32_32 = arith.constant 8 : i32
    %102 = tpu.dynamic_rotate %101 by %c8_i32_32 dim 1 : vector<2x128xf32>, i32 -> vector<2x128xf32>
    %103 = arith.addf %101, %102 : vector<2x128xf32>
    %c16_i32_33 = arith.constant 16 : i32
    %104 = tpu.dynamic_rotate %103 by %c16_i32_33 dim 1 : vector<2x128xf32>, i32 -> vector<2x128xf32>
    %105 = arith.addf %103, %104 : vector<2x128xf32>
    %c32_i32_34 = arith.constant 32 : i32
    %106 = tpu.dynamic_rotate %105 by %c32_i32_34 dim 1 : vector<2x128xf32>, i32 -> vector<2x128xf32>
    %107 = arith.addf %105, %106 : vector<2x128xf32>
    %c64_i32_35 = arith.constant 64 : i32
    %108 = tpu.dynamic_rotate %107 by %c64_i32_35 dim 1 : vector<2x128xf32>, i32 -> vector<2x128xf32>
    %109 = arith.addf %107, %108 : vector<2x128xf32>
    %cst_36 = arith.constant 0.001953125 : f32
    %110 = vector.broadcast %cst_36 : f32 to vector<2x128xf32>
    %111 = arith.mulf %109, %110 : vector<2x128xf32>
    %112 = vector.extract_strided_slice %111 {offsets = [0, 0], sizes = [1, 128], strides = [1, 1]} : vector<2x128xf32> to vector<1x128xf32>
    %113 = vector.extract_strided_slice %111 {offsets = [1, 0], sizes = [1, 128], strides = [1, 1]} : vector<2x128xf32> to vector<1x128xf32>
    %114 = arith.mulf %112, %112 : vector<1x128xf32>
    %115 = arith.subf %113, %114 : vector<1x128xf32>
    %cst_37 = arith.constant 0.000000e+00 : f32
    %116 = vector.broadcast %cst_37 : f32 to vector<1x128xf32>
    %117 = arith.maximumf %115, %116 : vector<1x128xf32>
    %c0_38 = arith.constant 0 : index
    %c0_39 = arith.constant 0 : index
    %118 = vector.load %arg5[%c0_38, %c0_39] : memref<1x128xf32, #tpu.memory_space<vmem>>, vector<1x128xf32>
    %cst_40 = arith.constant 9.99999974E-6 : f32
    %119 = vector.broadcast %cst_40 : f32 to vector<1x128xf32>
    %120 = arith.addf %117, %119 : vector<1x128xf32>
    %121 = math.rsqrt %120 : vector<1x128xf32>
    %122 = arith.mulf %118, %121 : vector<1x128xf32>
    %c0_41 = arith.constant 0 : index
    %c0_42 = arith.constant 0 : index
    %123 = vector.load %arg6[%c0_41, %c0_42] : memref<1x128xf32, #tpu.memory_space<vmem>>, vector<1x128xf32>
    %124 = arith.mulf %112, %122 : vector<1x128xf32>
    %125 = arith.subf %123, %124 : vector<1x128xf32>
    %126 = vector.broadcast %122 : vector<1x128xf32> to vector<32x128xf32>
    %127 = arith.mulf %95, %126 : vector<32x128xf32>
    %128 = vector.broadcast %125 : vector<1x128xf32> to vector<32x128xf32>
    %129 = arith.addf %127, %128 : vector<32x128xf32>
    %cst_43 = arith.constant 0.000000e+00 : f32
    %130 = vector.broadcast %cst_43 : f32 to vector<32x128xf32>
    %131 = arith.maximumf %129, %130 : vector<32x128xf32>
    %c0_44 = arith.constant 0 : index
    %c0_45 = arith.constant 0 : index
    %132 = vector.load %arg7[%c0_44, %c0_45] : memref<32x128xf32, #tpu.memory_space<vmem>>, vector<32x128xf32>
    tpu.vector_store %arg7[%c0_44, %c0_45], %131 {strides = array<i32>} : memref<32x128xf32, #tpu.memory_space<vmem>>, vector<32x128xf32>,
    return
  }
}

</mosaic_0001>

<llo_original>
// kernel: tpu_custom_call.1
$region0: #{tpu_custom_call.1}
  #allocation0 [shape = 'u32[]', space=smem, size = 0x4, offset = 0x4, fixed_abs, tag = 'smem constant byte address 0x4 - core index']
  #allocation1 [shape = 'u32[144,128]{1,0:T(1,128)}', space=vmem, size = 0x12000, scoped, tag = 'internal scratch']
  %s0 = inlined_call_operand.hbm [shape: f32[32,64], index: 0, kind: input, shape index: {}]
  %s1 = inlined_call_operand.hbm [shape: f32[192,128], index: 1, kind: input, shape index: {}]
  %s2 = inlined_call_operand.hbm [shape: f32[384,128], index: 2, kind: input, shape index: {}]
  %s3 = inlined_call_operand.vmem [shape: f32[1,128], index: 3, kind: input, shape index: {}]
  %s4 = inlined_call_operand.vmem [shape: f32[1,128], index: 4, kind: input, shape index: {}]
  %s5 = inlined_call_operand.vmem [shape: f32[1,128], index: 5, kind: input, shape index: {}]
  %s6 = inlined_call_operand.vmem [shape: f32[1,128], index: 6, kind: input, shape index: {}]
  %s7 = inlined_call_operand.hbm [shape: f32[32,128], index: 7, kind: output, shape index: {}]
  %s8 = sld [smem:[#allocation0]]
  $region50: #{tpu_custom_call.1} parent=0
    _
  %s10 = ssub.s32 1, %s8
  %s11 = scalar_select 0, %s10, %s8
  $region1: #{tpu_custom_call.1} parent=0
    #allocation2 [shape = 'u8[16384]{0}', space=vmem, size = 0x4000, scoped, tag = 'input window, operand 0, single buffered']
    #allocation3 [shape = 's32[1]{0}', space=sflag, size = 0x4, scoped, tag = 'scoped memory for tpu_custom_call.1']
    #allocation4 [shape = 's32[1]{0}', space=sflag, size = 0x4, scoped, tag = 'scoped memory for tpu_custom_call.1']
    #allocation5 [shape = 'u8[98304]{0}', space=vmem, size = 0x18000, scoped, tag = 'input window, operand 1, single buffered']
    #allocation6 [shape = 's32[1]{0}', space=sflag, size = 0x4, scoped, tag = 'scoped memory for tpu_custom_call.1']
    #allocation7 [shape = 'u8[196608]{0}', space=vmem, size = 0x30000, scoped, tag = 'input window, operand 2, single buffered']
    #allocation8 [shape = 'u8[16384]{0}', space=vmem, size = 0x4000, scoped, tag = 'output window, operand 0, single buffered']
    %12 = vsyncpa [#allocation3], 0
    %13 = vsyncpa [#allocation6], 0
    %14 = vsyncpa [#allocation4], 0
    // Predicated region
    $region2: #{tpu_custom_call.1} parent=1 // pred_check
      _
    $region3: #{tpu_custom_call.1} parent=1 // pred_check_branch
      %16 = sbr.rel (0) target = $region5
    $region4: #{tpu_custom_call.1} parent=1 // pred_region
      %s18 = ssub.s32 512, 512
      %19 = vsyncadd [#allocation3], %s18
      %s20 = sshll.u32 [#allocation2], 4
      %s21 = int_to_ptr.vmem [resolvable:$true] %s20
      %26 = dma.hbm_to_vmem [thread:$0]  %s0, 512, %s21, [#allocation3], 128, 128, 8
    $region5: #{tpu_custom_call.1} parent=1 // pred_fallthru
      _
    // Predicated region
    $region6: #{tpu_custom_call.1} parent=1 // pred_check
      _
    $region7: #{tpu_custom_call.1} parent=1 // pred_check_branch
      %28 = sbr.rel (0) target = $region9
    $region8: #{tpu_custom_call.1} parent=1 // pred_region
      %s30 = ssub.s32 3072, 3072
      %31 = vsyncadd [#allocation6], %s30
      %s32 = sshll.u32 [#allocation5], 4
      %s33 = int_to_ptr.vmem [resolvable:$true] %s32
      %38 = dma.hbm_to_vmem [thread:$0]  %s1, 3072, %s33, [#allocation6], 128, 128, 8
    $region9: #{tpu_custom_call.1} parent=1 // pred_fallthru
      _
    // Predicated region
    $region10: #{tpu_custom_call.1} parent=1 // pred_check
      _
    $region11: #{tpu_custom_call.1} parent=1 // pred_check_branch
      %40 = sbr.rel (0) target = $region13
    $region12: #{tpu_custom_call.1} parent=1 // pred_region
      %s42 = ssub.s32 6144, 6144
      %43 = vsyncadd [#allocation6], %s42
      %s44 = sshll.u32 [#allocation7], 4
      %s45 = int_to_ptr.vmem [resolvable:$true] %s44
      %50 = dma.hbm_to_vmem [thread:$0]  %s2, 6144, %s45, [#allocation6], 128, 128, 8
    $region13: #{tpu_custom_call.1} parent=1 // pred_fallthru
      _
    // Predicated region
    $region14: #{tpu_custom_call.1} parent=1 // pred_check
      _
    $region15: #{tpu_custom_call.1} parent=1 // pred_check_branch
      %52 = sbr.rel (0) target = $region17
    $region16: #{tpu_custom_call.1} parent=1 // pred_region
      _
    $region17: #{tpu_custom_call.1} parent=1 // pred_fallthru
      _
    // Predicated region
    $region18: #{tpu_custom_call.1} parent=1 // pred_check
      _
    $region19: #{tpu_custom_call.1} parent=1 // pred_check_branch
      %54 = sbr.rel (0) target = $region21
    $region20: #{tpu_custom_call.1} parent=1 // pred_region
      _
    $region21: #{tpu_custom_call.1} parent=1 // pred_fallthru
      _
    // Predicated region
    $region22: #{tpu_custom_call.1} parent=1 // pred_check
      _
    $region23: #{tpu_custom_call.1} parent=1 // pred_check_branch
      %56 = sbr.rel (0) target = $region25
    $region24: #{tpu_custom_call.1} parent=1 // pred_region
      _
    $region25: #{tpu_custom_call.1} parent=1 // pred_fallthru
      _
    // Predicated region
    $region26: #{tpu_custom_call.1} parent=1 // pred_check
      _
    $region27: #{tpu_custom_call.1} parent=1 // pred_check_branch
      %58 = sbr.rel (0) target = $region29
    $region28: #{tpu_custom_call.1} parent=1 // pred_region
      _
    $region29: #{tpu_custom_call.1} parent=1 // pred_fallthru
      _
    // Predicated region
    $region30: #{tpu_custom_call.1} parent=1 // pred_check
      _
    $region31: #{tpu_custom_call.1} parent=1 // pred_check_branch
      %60 = sbr.rel (0) target = $region33
    $region32: #{tpu_custom_call.1} parent=1 // pred_region
      %61 = dma.done [#allocation3], 512
    $region33: #{tpu_custom_call.1} parent=1 // pred_fallthru
      _
    // Predicated region
    $region34: #{tpu_custom_call.1} parent=1 // pred_check
      _
    $region35: #{tpu_custom_call.1} parent=1 // pred_check_branch
      %63 = sbr.rel (0) target = $region37
    $region36: #{tpu_custom_call.1} parent=1 // pred_region
      %64 = dma.done [#allocation6], 3072
    $region37: #{tpu_custom_call.1} parent=1 // pred_fallthru
      _
    // Predicated region
    $region38: #{tpu_custom_call.1} parent=1 // pred_check
      _
    $region39: #{tpu_custom_call.1} parent=1 // pred_check_branch
      %66 = sbr.rel (0) target = $region41
    $region40: #{tpu_custom_call.1} parent=1 // pred_region
      %67 = dma.done [#allocation6], 6144
    $region41: #{tpu_custom_call.1} parent=1 // pred_fallthru
      _
    %v68 = vlaneseq
    %v69 = vshrl.u32 %v68, 7
    %v70 = vadd.s32 %v69, 8
    %v71 = vadd.s32 %v69, 16
    %v72 = vadd.s32 %v69, 24
    %vm73 = vcmp.lt.s32.totalorder %v69, 0
    %v74 = vsub.s32 0, %v69
    %v75 = vsel %vm73, %v74, %v69
    %v76 = vshrl.u32 %v75, 4
    %v77 = vand.u32 %v75, 15
    %v78 = vsub.s32 0, %v77
    %v79 = vsel %vm73, %v78, %v77
    %vm80 = vcmp.lt.s32.totalorder %v70, 0
    %v81 = vsub.s32 0, %v70
    %v82 = vsel %vm80, %v81, %v70
    %v83 = vshrl.u32 %v82, 4
    %v84 = vand.u32 %v82, 15
    %v85 = vsub.s32 0, %v84
    %v86 = vsel %vm80, %v85, %v84
    %vm87 = vcmp.lt.s32.totalorder %v71, 0
    %v88 = vsub.s32 0, %v71
    %v89 = vsel %vm87, %v88, %v71
    %v90 = vshrl.u32 %v89, 4
    %v91 = vand.u32 %v89, 15
    %v92 = vsub.s32 0, %v91
    %v93 = vsel %vm87, %v92, %v91
    %vm94 = vcmp.lt.s32.totalorder %v72, 0
    %v95 = vsub.s32 0, %v72
    %v96 = vsel %vm94, %v95, %v72
    %v97 = vshrl.u32 %v96, 4
    %v98 = vand.u32 %v96, 15
    %v99 = vsub.s32 0, %v98
    %v100 = vsel %vm94, %v99, %v98
    %vm101 = vcmp.ne.s32.totalorder %v79, 0
    %vm102 = vcmp.ne.s32.totalorder %v86, 0
    %vm103 = vcmp.ne.s32.totalorder %v93, 0
    %vm104 = vcmp.ne.s32.totalorder %v100, 0
    %vm105 = vcmp.lt.s32.totalorder %v79, 0
    %vm106 = vcmp.lt.s32.totalorder %v86, 0
    %vm107 = vcmp.lt.s32.totalorder %v93, 0
    %vm108 = vcmp.lt.s32.totalorder %v100, 0
    %vm109 = vmand %vm105, %vm101
    %vm110 = vmand %vm106, %vm102
    %vm111 = vmand %vm107, %vm103
    %vm112 = vmand %vm108, %vm104
    %v113 = vadd.s32 %v79, 16
    %v114 = vadd.s32 %v86, 16
    %v115 = vadd.s32 %v93, 16
    %v116 = vadd.s32 %v100, 16
    %v117 = vsel %vm109, %v113, %v79
    %v118 = vsel %vm110, %v114, %v86
    %v119 = vsel %vm111, %v115, %v93
    %v120 = vsel %vm112, %v116, %v100
    %vm121 = vcmp.ne.s32.totalorder %v117, 0
    %vm122 = vcmp.ne.s32.totalorder %v118, 0
    %vm123 = vcmp.ne.s32.totalorder %v119, 0
    %vm124 = vcmp.ne.s32.totalorder %v120, 0
    %v125 = vsel %vm121, 1, 0
    %v126 = vsel %vm122, 1, 0
    %v127 = vsel %vm123, 1, 0
    %v128 = vsel %vm124, 1, 0
    %v129 = vcvt.s32.f32 %v125
    %v130 = vcvt.s32.f32 %v126
    %v131 = vcvt.s32.f32 %v127
    %v132 = vcvt.s32.f32 %v128
    %vm133 = vcmp.ne.s32.totalorder %v117, 15
    %vm134 = vcmp.ne.s32.totalorder %v118, 15
    %vm135 = vcmp.ne.s32.totalorder %v119, 15
    %vm136 = vcmp.ne.s32.totalorder %v120, 15
    %v137 = vsel %vm133, 1, 0
    %v138 = vsel %vm134, 1, 0
    %v139 = vsel %vm135, 1, 0
    %v140 = vsel %vm136, 1, 0
    %v141 = vcvt.s32.f32 %v137
    %v142 = vcvt.s32.f32 %v138
    %v143 = vcvt.s32.f32 %v139
    %v144 = vcvt.s32.f32 %v140
    %v145 = vld [vmem:[#allocation2] sm:$0xff]
    %v146 = vld [vmem:[#allocation2 + $0x8] sm:$0xff]
    %v147 = vld [vmem:[#allocation2 + $0x10] sm:$0xff]
    %v148 = vld [vmem:[#allocation2 + $0x18] sm:$0xff]
    %v149 = vrot.slane %v145, 7
    %v150 = vrot.slane %v146, 7
    %v151 = vrot.slane %v147, 7
    %v152 = vrot.slane %v148, 7
    %vm153 = vcmp.lt.s32.totalorder %v69, 1
    %v154 = vsel %vm153, %v151, %v152
    %v155 = vsel %vm153, %v150, %v151
    %v156 = vsel %vm153, %v149, %v150
    %v157 = vsel %vm153, %v152, %v149
    %v158 = vmul.f32 %v157, %v129
    %v159 = vmul.f32 %v156, %v130
    %v160 = vmul.f32 %v155, %v131
    %v161 = vmul.f32 %v154, %v132
    %v162 = vrot.slane %v145, 1
    %v163 = vrot.slane %v146, 1
    %v164 = vrot.slane %v147, 1
    %v165 = vrot.slane %v148, 1
    %vm166 = vcmp.lt.s32.totalorder %v69, 7
    %v167 = vsel %vm166, %v164, %v165
    %v168 = vsel %vm166, %v163, %v164
    %v169 = vsel %vm166, %v162, %v163
    %v170 = vsel %vm166, %v165, %v162
    %v171 = vmul.f32 %v169, %v141
    %v172 = vmul.f32 %v168, %v142
    %v173 = vmul.f32 %v167, %v143
    %v174 = vmul.f32 %v170, %v144
    %v175 = vld [vmem:[#allocation5] sm:$0xff]
    %v176 = vld [vmem:[#allocation5 + $0x8] sm:$0xff]
    %v177 = vld [vmem:[#allocation5 + $0x10] sm:$0xff]
    %v178 = vld [vmem:[#allocation5 + $0x18] sm:$0xff]
    %v179 = vld [vmem:[#allocation5 + $0x20] sm:$0xff]
    %v180 = vld [vmem:[#allocation5 + $0x28] sm:$0xff]
    %v181 = vld [vmem:[#allocation5 + $0x30] sm:$0xff]
    %v182 = vld [vmem:[#allocation5 + $0x38] sm:$0xff]
    %v183 = vld [vmem:[#allocation5 + $0x40] sm:$0xff]
    %v184 = vld [vmem:[#allocation5 + $0x48] sm:$0xff]
    %v185 = vld [vmem:[#allocation5 + $0x50] sm:$0xff]
    %v186 = vld [vmem:[#allocation5 + $0x58] sm:$0xff]
    %v187 = vld [vmem:[#allocation5 + $0x60] sm:$0xff]
    %v188 = vld [vmem:[#allocation5 + $0x68] sm:$0xff]
    %v189 = vld [vmem:[#allocation5 + $0x70] sm:$0xff]
    %v190 = vld [vmem:[#allocation5 + $0x78] sm:$0xff]
    %v191 = vld [vmem:[#allocation5 + $0x80] sm:$0xff]
    %v192 = vld [vmem:[#allocation5 + $0x88] sm:$0xff]
    %v193 = vld [vmem:[#allocation5 + $0x90] sm:$0xff]
    %v194 = vld [vmem:[#allocation5 + $0x98] sm:$0xff]
    %v195 = vld [vmem:[#allocation5 + $0xa0] sm:$0xff]
    %v196 = vld [vmem:[#allocation5 + $0xa8] sm:$0xff]
    %v197 = vld [vmem:[#allocation5 + $0xb0] sm:$0xff]
    %v198 = vld [vmem:[#allocation5 + $0xb8] sm:$0xff]
    %203 = vrot.lane.b32.xlu0 %v145, 64
    %v204 = vpop.permute.xlu0 %203
    %205 = vrot.lane.b32.xlu0 %v146, 64
    %v206 = vpop.permute.xlu0 %205
    %207 = vrot.lane.b32.xlu0 %v147, 64
    %v208 = vpop.permute.xlu0 %207
    %209 = vrot.lane.b32.xlu0 %v148, 64
    %v210 = vpop.permute.xlu0 %209
    %vm215 = vcmask 523264
    %v216 = vsel %vm215, %v158, %v204
    %v217 = vsel %vm215, %v159, %v206
    %v218 = vsel %vm215, %v160, %v208
    %v219 = vsel %vm215, %v161, %v210
    %v221 = vsel %vm215, %v171, 0
    %v224 = vsel %vm215, %v172, 0
    %v227 = vsel %vm215, %v173, 0
    %v230 = vsel %vm215, %v174, 0
    %232 = vmatprep.subr.mxu0 0.0
    %233 = vmatpush1.msra.mxu0 %v190
    %234 = vmatprep.subr.mxu0 0.0
    %235 = vmatpush1.msra.mxu0 %v189
    %236 = vmatprep.subr.mxu0 0.0
    %237 = vmatpush1.msra.mxu0 %v188
    %238 = vmatprep.subr.mxu0 0.0
    %239 = vmatpush1.msra.mxu0 %v187
    %240 = vmatprep.subr.mxu0 0.0
    %241 = vmatpush1.msra.mxu0 %v186
    %242 = vmatprep.subr.mxu0 0.0
    %243 = vmatpush1.msra.mxu0 %v185
    %244 = vmatprep.subr.mxu0 0.0
    %245 = vmatpush1.msra.mxu0 %v184
    %246 = vmatprep.subr.mxu0 0.0
    %247 = vmatpush1.msra.mxu0 %v183
    %248 = vmatprep.subr.mxu0 0.0
    %249 = vmatpush1.msra.mxu0 %v182
    %250 = vmatprep.subr.mxu0 0.0
    %251 = vmatpush1.msra.mxu0 %v181
    %252 = vmatprep.subr.mxu0 0.0
    %253 = vmatpush1.msra.mxu0 %v180
    %254 = vmatprep.subr.mxu0 0.0
    %255 = vmatpush1.msra.mxu0 %v179
    %256 = vmatprep.subr.mxu0 0.0
    %257 = vmatpush1.msra.mxu0 %v178
    %258 = vmatprep.subr.mxu0 0.0
    %259 = vmatpush1.msra.mxu0 %v177
    %260 = vmatprep.subr.mxu0 0.0
    %261 = vmatpush1.msra.mxu0 %v176
    %262 = vmatprep.subr.mxu0 0.0
    %263 = vmatpush1.msra.mxu0 %v175
    %264 = vmatprep.subr.mxu0 0.0
    %265 = vmatpush2.msra.mxu0 0.0
    %266 = vmatprep.subr.mxu0 0.0
    %267 = vmatpush2.msra.mxu0 0.0
    %268 = vmatprep.subr.mxu0 0.0
    %269 = vmatpush2.msra.mxu0 0.0
    %270 = vmatprep.subr.mxu0 0.0
    %271 = vmatpush2.msra.mxu0 0.0
    %272 = vmatprep.subr.mxu0 0.0
    %273 = vmatpush2.msra.mxu0 0.0
    %274 = vmatprep.subr.mxu0 0.0
    %275 = vmatpush2.msra.mxu0 0.0
    %276 = vmatprep.subr.mxu0 0.0
    %277 = vmatpush2.msra.mxu0 0.0
    %278 = vmatprep.subr.mxu0 0.0
    %279 = vmatpush2.msra.mxu0 0.0
    %280 = vmatprep.subr.mxu0 0.0
    %281 = vmatpush2.msra.mxu0 %v198
    %282 = vmatprep.subr.mxu0 0.0
    %283 = vmatpush2.msra.mxu0 %v197
    %284 = vmatprep.subr.mxu0 0.0
    %285 = vmatpush2.msra.mxu0 %v196
    %286 = vmatprep.subr.mxu0 0.0
    %287 = vmatpush2.msra.mxu0 %v195
    %288 = vmatprep.subr.mxu0 0.0
    %289 = vmatpush2.msra.mxu0 %v194
    %290 = vmatprep.subr.mxu0 0.0
    %291 = vmatpush2.msra.mxu0 %v193
    %292 = vmatprep.subr.mxu0 0.0
    %293 = vmatpush2.msra.mxu0 %v192
    %294 = vmatprep.subr.mxu0 0.0
    %295 = vmatpush2.msra.mxu0 %v191
    %296 = vmatprep.mubr.f32.mxu0 %v221
    %297 = vmatmul.mubr.f32.gmra.mxu0 %v216
    %v298 = vpop.f32.mrf.mxu0
    %v299 = vadd.f32 0.0, %v298
    %v300 = vpop.f32.mrf.mxu0
    %301 = vmatprep.mubr.f32.mxu0 %v224
    %302 = vmatmul.mubr.f32.gmra.mxu0 %v217
    %v303 = vpop.f32.mrf.mxu0
    %v304 = vadd.f32 0.0, %v303
    %v305 = vpop.f32.mrf.mxu0
    %306 = vmatprep.mubr.f32.mxu0 %v227
    %307 = vmatmul.mubr.f32.gmra.mxu0 %v218
    %v308 = vpop.f32.mrf.mxu0
    %v309 = vadd.f32 0.0, %v308
    %v310 = vpop.f32.mrf.mxu0
    %311 = vmatprep.mubr.f32.mxu0 %v230
    %312 = vmatmul.mubr.f32.gmra.mxu0 %v219
    %v313 = vpop.f32.mrf.mxu0
    %v314 = vadd.f32 0.0, %v313
    %v315 = vpop.f32.mrf.mxu0
    %316 = vdwg.mxu0
    %v317 = vadd.f32 %v299, %v304
    %v318 = vadd.f32 %v317, %v309
    %v319 = vadd.f32 %v318, %v314
    %v320 = vrot.slane %v319, 4
    %v321 = vadd.f32 %v319, %v320
    %v322 = vrot.slane %v321, 2
    %v323 = vadd.f32 %v321, %v322
    %v324 = vrot.slane %v323, 1
    %v325 = vadd.f32 %v323, %v324
    %v326 = vmul.f32 %v299, %v299
    %v327 = vmul.f32 %v304, %v304
    %v328 = vmul.f32 %v309, %v309
    %v329 = vmul.f32 %v314, %v314
    %v330 = vadd.f32 %v326, %v327
    %v331 = vadd.f32 %v330, %v328
    %v332 = vadd.f32 %v331, %v329
    %v333 = vrot.slane %v332, 4
    %v334 = vadd.f32 %v332, %v333
    %v335 = vrot.slane %v334, 2
    %v336 = vadd.f32 %v334, %v335
    %v337 = vrot.slane %v336, 1
    %v338 = vadd.f32 %v336, %v337
    %vm339 = vcmask 1040384
    %v340 = vsel %vm339, %v325, %v338
    %341 = vrot.lane.b32.xlu0 %v340, 8
    %v342 = vpop.permute.xlu0 %341
    %v343 = vadd.f32 %v340, %v342
    %344 = vrot.lane.b32.xlu0 %v343, 16
    %v345 = vpop.permute.xlu0 %344
    %v346 = vadd.f32 %v343, %v345
    %347 = vrot.lane.b32.xlu0 %v346, 32
    %v348 = vpop.permute.xlu0 %347
    %v349 = vadd.f32 %v346, %v348
    %350 = vrot.lane.b32.xlu0 %v349, 64
    %v351 = vpop.permute.xlu0 %350
    %v352 = vadd.f32 %v349, %v351
    %v353 = vmul.f32 %v352, 0.001953125
    %v354 = vmul.f32 %v353, %v353
    %v356 = vrot.slane %v354, 7
    %v358 = vsub.f32 %v353, %v356
    %v359 = vmax.f32 %v358, 0.0
    %v360 = vld [vmem:[%s3] sm:$0x1]
    %v361 = vadd.f32 %v359, 1e-05
    %v362 = vrsqrt.pop %v361
    %v365 = vunpack.c.l.s4 1966171168
    %v366 = vunpack.c.0.s8 %v365
    %v367 = vlaneseq
    %v368 = vshrl.u32 %v367, 7
    %v369 = vsub.s32 %v366, %v368
    %v370 = vrot.slane %v362, %v369
    %v371 = vcombine.high %v370, %v370
    %v373 = vunpack.c.l.s4 1966171168
    %v374 = vunpack.c.0.s8 %v373
    %v375 = vlaneseq
    %v376 = vshrl.u32 %v375, 7
    %v377 = vsub.s32 %v374, %v376
    %v378 = vrot.slane %v371, %v377
    %v380 = vmul.f32 %v360, %v378
    %v381 = vld [vmem:[%s4] sm:$0x1]
    %v382 = vmul.f32 %v353, %v380
    %v383 = vsub.f32 %v381, %v382
    %v385 = vlaneseq
    %v386 = vshrl.u32 %v385, 7
    %v387 = vsub.s32 0, %v386
    %v388 = vrot.slane %v380, %v387
    %v390 = vmul.f32 %v299, %v388
    %v391 = vmul.f32 %v304, %v388
    %v392 = vmul.f32 %v309, %v388
    %v393 = vmul.f32 %v314, %v388
    %v395 = vlaneseq
    %v396 = vshrl.u32 %v395, 7
    %v397 = vsub.s32 0, %v396
    %v398 = vrot.slane %v383, %v397
    %v400 = vadd.f32 %v390, %v398
    %v401 = vadd.f32 %v391, %v398
    %v402 = vadd.f32 %v392, %v398
    %v403 = vadd.f32 %v393, %v398
    %v404 = vmax.f32 %v400, 0.0
    %v405 = vmax.f32 %v401, 0.0
    %v406 = vmax.f32 %v402, 0.0
    %v407 = vmax.f32 %v403, 0.0
    %v408 = vrot.slane %v404, 7
    %v409 = vrot.slane %v405, 7
    %v410 = vrot.slane %v406, 7
    %v411 = vrot.slane %v407, 7
    %v412 = vsel %vm153, %v410, %v411
    %v413 = vsel %vm153, %v409, %v410
    %v414 = vsel %vm153, %v408, %v409
    %v415 = vsel %vm153, %v411, %v408
    %v416 = vmul.f32 %v415, %v129
    %v417 = vmul.f32 %v414, %v130
    %v418 = vmul.f32 %v413, %v131
    %v419 = vmul.f32 %v412, %v132
    %v420 = vrot.slane %v404, 1
    %v421 = vrot.slane %v405, 1
    %v422 = vrot.slane %v406, 1
    %v423 = vrot.slane %v407, 1
    %v424 = vsel %vm166, %v422, %v423
    %v425 = vsel %vm166, %v421, %v422
    %v426 = vsel %vm166, %v420, %v421
    %v427 = vsel %vm166, %v423, %v420
    %v428 = vmul.f32 %v426, %v141
    %v429 = vmul.f32 %v425, %v142
    %v430 = vmul.f32 %v424, %v143
    %v431 = vmul.f32 %v427, %v144
    %v432 = vld [vmem:[#allocation7] sm:$0xff]
    %v433 = vld [vmem:[#allocation7 + $0x8] sm:$0xff]
    %v434 = vld [vmem:[#allocation7 + $0x10] sm:$0xff]
    %v435 = vld [vmem:[#allocation7 + $0x18] sm:$0xff]
    %v436 = vld [vmem:[#allocation7 + $0x20] sm:$0xff]
    %v437 = vld [vmem:[#allocation7 + $0x28] sm:$0xff]
    %v438 = vld [vmem:[#allocation7 + $0x30] sm:$0xff]
    %v439 = vld [vmem:[#allocation7 + $0x38] sm:$0xff]
    %v440 = vld [vmem:[#allocation7 + $0x40] sm:$0xff]
    %v441 = vld [vmem:[#allocation7 + $0x48] sm:$0xff]
    %v442 = vld [vmem:[#allocation7 + $0x50] sm:$0xff]
    %v443 = vld [vmem:[#allocation7 + $0x58] sm:$0xff]
    %v444 = vld [vmem:[#allocation7 + $0x60] sm:$0xff]
    %v445 = vld [vmem:[#allocation7 + $0x68] sm:$0xff]
    %v446 = vld [vmem:[#allocation7 + $0x70] sm:$0xff]
    %v447 = vld [vmem:[#allocation7 + $0x78] sm:$0xff]
    %v448 = vld [vmem:[#allocation7 + $0x80] sm:$0xff]
    %v449 = vld [vmem:[#allocation7 + $0x88] sm:$0xff]
    %v450 = vld [vmem:[#allocation7 + $0x90] sm:$0xff]
    %v451 = vld [vmem:[#allocation7 + $0x98] sm:$0xff]
    %v452 = vld [vmem:[#allocation7 + $0xa0] sm:$0xff]
    %v453 = vld [vmem:[#allocation7 + $0xa8] sm:$0xff]
    %v454 = vld [vmem:[#allocation7 + $0xb0] sm:$0xff]
    %v455 = vld [vmem:[#allocation7 + $0xb8] sm:$0xff]
    %v456 = vld [vmem:[#allocation7 + $0xc0] sm:$0xff]
    %v457 = vld [vmem:[#allocation7 + $0xc8] sm:$0xff]
    %v458 = vld [vmem:[#allocation7 + $0xd0] sm:$0xff]
    %v459 = vld [vmem:[#allocation7 + $0xd8] sm:$0xff]
    %v460 = vld [vmem:[#allocation7 + $0xe0] sm:$0xff]
    %v461 = vld [vmem:[#allocation7 + $0xe8] sm:$0xff]
    %v462 = vld [vmem:[#allocation7 + $0xf0] sm:$0xff]
    %v463 = vld [vmem:[#allocation7 + $0xf8] sm:$0xff]
    %v464 = vld [vmem:[#allocation7 + $0x100] sm:$0xff]
    %v465 = vld [vmem:[#allocation7 + $0x108] sm:$0xff]
    %v466 = vld [vmem:[#allocation7 + $0x110] sm:$0xff]
    %v467 = vld [vmem:[#allocation7 + $0x118] sm:$0xff]
    %v468 = vld [vmem:[#allocation7 + $0x120] sm:$0xff]
    %v469 = vld [vmem:[#allocation7 + $0x128] sm:$0xff]
    %v470 = vld [vmem:[#allocation7 + $0x130] sm:$0xff]
    %v471 = vld [vmem:[#allocation7 + $0x138] sm:$0xff]
    %v472 = vld [vmem:[#allocation7 + $0x140] sm:$0xff]
    %v473 = vld [vmem:[#allocation7 + $0x148] sm:$0xff]
    %v474 = vld [vmem:[#allocation7 + $0x150] sm:$0xff]
    %v475 = vld [vmem:[#allocation7 + $0x158] sm:$0xff]
    %v476 = vld [vmem:[#allocation7 + $0x160] sm:$0xff]
    %v477 = vld [vmem:[#allocation7 + $0x168] sm:$0xff]
    %v478 = vld [vmem:[#allocation7 + $0x170] sm:$0xff]
    %v479 = vld [vmem:[#allocation7 + $0x178] sm:$0xff]
    %480 = vmatprep.subr.mxu0 0.0
    %481 = vmatpush1.msra.mxu0 %v447
    %482 = vmatprep.subr.mxu0 0.0
    %483 = vmatpush1.msra.mxu0 %v446
    %484 = vmatprep.subr.mxu0 0.0
    %485 = vmatpush1.msra.mxu0 %v445
    %486 = vmatprep.subr.mxu0 0.0
    %487 = vmatpush1.msra.mxu0 %v444
    %488 = vmatprep.subr.mxu0 0.0
    %489 = vmatpush1.msra.mxu0 %v443
    %490 = vmatprep.subr.mxu0 0.0
    %491 = vmatpush1.msra.mxu0 %v442
    %492 = vmatprep.subr.mxu0 0.0
    %493 = vmatpush1.msra.mxu0 %v441
    %494 = vmatprep.subr.mxu0 0.0
    %495 = vmatpush1.msra.mxu0 %v440
    %496 = vmatprep.subr.mxu0 0.0
    %497 = vmatpush1.msra.mxu0 %v439
    %498 = vmatprep.subr.mxu0 0.0
    %499 = vmatpush1.msra.mxu0 %v438
    %500 = vmatprep.subr.mxu0 0.0
    %501 = vmatpush1.msra.mxu0 %v437
    %502 = vmatprep.subr.mxu0 0.0
    %503 = vmatpush1.msra.mxu0 %v436
    %504 = vmatprep.subr.mxu0 0.0
    %505 = vmatpush1.msra.mxu0 %v435
    %506 = vmatprep.subr.mxu0 0.0
    %507 = vmatpush1.msra.mxu0 %v434
    %508 = vmatprep.subr.mxu0 0.0
    %509 = vmatpush1.msra.mxu0 %v433
    %510 = vmatprep.subr.mxu0 0.0
    %511 = vmatpush1.msra.mxu0 %v432
    %512 = vmatprep.subr.mxu0 0.0
    %513 = vmatpush2.msra.mxu0 %v463
    %514 = vmatprep.subr.mxu0 0.0
    %515 = vmatpush2.msra.mxu0 %v462
    %516 = vmatprep.subr.mxu0 0.0
    %517 = vmatpush2.msra.mxu0 %v461
    %518 = vmatprep.subr.mxu0 0.0
    %519 = vmatpush2.msra.mxu0 %v460
    %520 = vmatprep.subr.mxu0 0.0
    %521 = vmatpush2.msra.mxu0 %v459
    %522 = vmatprep.subr.mxu0 0.0
    %523 = vmatpush2.msra.mxu0 %v458
    %524 = vmatprep.subr.mxu0 0.0
    %525 = vmatpush2.msra.mxu0 %v457
    %526 = vmatprep.subr.mxu0 0.0
    %527 = vmatpush2.msra.mxu0 %v456
    %528 = vmatprep.subr.mxu0 0.0
    %529 = vmatpush2.msra.mxu0 %v455
    %530 = vmatprep.subr.mxu0 0.0
    %531 = vmatpush2.msra.mxu0 %v454
    %532 = vmatprep.subr.mxu0 0.0
    %533 = vmatpush2.msra.mxu0 %v453
    %534 = vmatprep.subr.mxu0 0.0
    %535 = vmatpush2.msra.mxu0 %v452
    %536 = vmatprep.subr.mxu0 0.0
    %537 = vmatpush2.msra.mxu0 %v451
    %538 = vmatprep.subr.mxu0 0.0
    %539 = vmatpush2.msra.mxu0 %v450
    %540 = vmatprep.subr.mxu0 0.0
    %541 = vmatpush2.msra.mxu0 %v449
    %542 = vmatprep.subr.mxu0 0.0
    %543 = vmatpush2.msra.mxu0 %v448
    %544 = vmatprep.mubr.f32.mxu0 %v404
    %545 = vmatmul.mubr.f32.gmra.mxu0 %v416
    %v546 = vpop.f32.mrf.mxu0
    %v547 = vadd.f32 0.0, %v546
    %v548 = vpop.f32.mrf.mxu0
    %549 = vmatprep.mubr.f32.mxu0 %v405
    %550 = vmatmul.mubr.f32.gmra.mxu0 %v417
    %v551 = vpop.f32.mrf.mxu0
    %v552 = vadd.f32 0.0, %v551
    %v553 = vpop.f32.mrf.mxu0
    %554 = vmatprep.mubr.f32.mxu0 %v406
    %555 = vmatmul.mubr.f32.gmra.mxu0 %v418
    %v556 = vpop.f32.mrf.mxu0
    %v557 = vadd.f32 0.0, %v556
    %v558 = vpop.f32.mrf.mxu0
    %559 = vmatprep.mubr.f32.mxu0 %v407
    %560 = vmatmul.mubr.f32.gmra.mxu0 %v419
    %v561 = vpop.f32.mrf.mxu0
    %v562 = vadd.f32 0.0, %v561
    %v563 = vpop.f32.mrf.mxu0
    %564 = vdwg.mxu0
    %565 = vmatprep.subr.mxu0 0.0
    %566 = vmatpush1.msra.mxu0 %v479
    %567 = vmatprep.subr.mxu0 0.0
    %568 = vmatpush1.msra.mxu0 %v478
    %569 = vmatprep.subr.mxu0 0.0
    %570 = vmatpush1.msra.mxu0 %v477
    %571 = vmatprep.subr.mxu0 0.0
    %572 = vmatpush1.msra.mxu0 %v476
    %573 = vmatprep.subr.mxu0 0.0
    %574 = vmatpush1.msra.mxu0 %v475
    %575 = vmatprep.subr.mxu0 0.0
    %576 = vmatpush1.msra.mxu0 %v474
    %577 = vmatprep.subr.mxu0 0.0
    %578 = vmatpush1.msra.mxu0 %v473
    %579 = vmatprep.subr.mxu0 0.0
    %580 = vmatpush1.msra.mxu0 %v472
    %581 = vmatprep.subr.mxu0 0.0
    %582 = vmatpush1.msra.mxu0 %v471
    %583 = vmatprep.subr.mxu0 0.0
    %584 = vmatpush1.msra.mxu0 %v470
    %585 = vmatprep.subr.mxu0 0.0
    %586 = vmatpush1.msra.mxu0 %v469
    %587 = vmatprep.subr.mxu0 0.0
    %588 = vmatpush1.msra.mxu0 %v468
    %589 = vmatprep.subr.mxu0 0.0
    %590 = vmatpush1.msra.mxu0 %v467
    %591 = vmatprep.subr.mxu0 0.0
    %592 = vmatpush1.msra.mxu0 %v466
    %593 = vmatprep.subr.mxu0 0.0
    %594 = vmatpush1.msra.mxu0 %v465
    %595 = vmatprep.subr.mxu0 0.0
    %596 = vmatpush1.msra.mxu0 %v464
    %597 = vmatprep.subr.mxu0 0.0
    %598 = vmatpush2.msra.mxu0 0.0
    %599 = vmatprep.subr.mxu0 0.0
    %600 = vmatpush2.msra.mxu0 0.0
    %601 = vmatprep.subr.mxu0 0.0
    %602 = vmatpush2.msra.mxu0 0.0
    %603 = vmatprep.subr.mxu0 0.0
    %604 = vmatpush2.msra.mxu0 0.0
    %605 = vmatprep.subr.mxu0 0.0
    %606 = vmatpush2.msra.mxu0 0.0
    %607 = vmatprep.subr.mxu0 0.0
    %608 = vmatpush2.msra.mxu0 0.0
    %609 = vmatprep.subr.mxu0 0.0
    %610 = vmatpush2.msra.mxu0 0.0
    %611 = vmatprep.subr.mxu0 0.0
    %612 = vmatpush2.msra.mxu0 0.0
    %613 = vmatprep.subr.mxu0 0.0
    %614 = vmatpush2.msra.mxu0 0.0
    %615 = vmatprep.subr.mxu0 0.0
    %616 = vmatpush2.msra.mxu0 0.0
    %617 = vmatprep.subr.mxu0 0.0
    %618 = vmatpush2.msra.mxu0 0.0
    %619 = vmatprep.subr.mxu0 0.0
    %620 = vmatpush2.msra.mxu0 0.0
    %621 = vmatprep.subr.mxu0 0.0
    %622 = vmatpush2.msra.mxu0 0.0
    %623 = vmatprep.subr.mxu0 0.0
    %624 = vmatpush2.msra.mxu0 0.0
    %625 = vmatprep.subr.mxu0 0.0
    %626 = vmatpush2.msra.mxu0 0.0
    %627 = vmatprep.subr.mxu0 0.0
    %628 = vmatpush2.msra.mxu0 0.0
    %629 = vmatprep.mubr.f32.mxu0 0.0
    %630 = vmatmul.mubr.f32.gmra.mxu0 %v428
    %v631 = vpop.f32.mrf.mxu0
    %v632 = vadd.f32 %v547, %v631
    %v633 = vpop.f32.mrf.mxu0
    %634 = vmatprep.mubr.f32.mxu0 0.0
    %635 = vmatmul.mubr.f32.gmra.mxu0 %v429
    %v636 = vpop.f32.mrf.mxu0
    %v637 = vadd.f32 %v552, %v636
    %v638 = vpop.f32.mrf.mxu0
    %639 = vmatprep.mubr.f32.mxu0 0.0
    %640 = vmatmul.mubr.f32.gmra.mxu0 %v430
    %v641 = vpop.f32.mrf.mxu0
    %v642 = vadd.f32 %v557, %v641
    %v643 = vpop.f32.mrf.mxu0
    %644 = vmatprep.mubr.f32.mxu0 0.0
    %645 = vmatmul.mubr.f32.gmra.mxu0 %v431
    %v646 = vpop.f32.mrf.mxu0
    %v647 = vadd.f32 %v562, %v646
    %v648 = vpop.f32.mrf.mxu0
    %649 = vdwg.mxu0
    %v650 = vadd.f32 %v632, %v637
    %v651 = vadd.f32 %v650, %v642
    %v652 = vadd.f32 %v651, %v647
    %v653 = vrot.slane %v652, 4
    %v654 = vadd.f32 %v652, %v653
    %v655 = vrot.slane %v654, 2
    %v656 = vadd.f32 %v654, %v655
    %v657 = vrot.slane %v656, 1
    %v658 = vadd.f32 %v656, %v657
    %v659 = vmul.f32 %v632, %v632
    %v660 = vmul.f32 %v637, %v637
    %v661 = vmul.f32 %v642, %v642
    %v662 = vmul.f32 %v647, %v647
    %v663 = vadd.f32 %v659, %v660
    %v664 = vadd.f32 %v663, %v661
    %v665 = vadd.f32 %v664, %v662
    %v666 = vrot.slane %v665, 4
    %v667 = vadd.f32 %v665, %v666
    %v668 = vrot.slane %v667, 2
    %v669 = vadd.f32 %v667, %v668
    %v670 = vrot.slane %v669, 1
    %v671 = vadd.f32 %v669, %v670
    %v672 = vsel %vm339, %v658, %v671
    %673 = vrot.lane.b32.xlu0 %v672, 8
    %v674 = vpop.permute.xlu0 %673
    %v675 = vadd.f32 %v672, %v674
    %676 = vrot.lane.b32.xlu0 %v675, 16
    %v677 = vpop.permute.xlu0 %676
    %v678 = vadd.f32 %v675, %v677
    %679 = vrot.lane.b32.xlu0 %v678, 32
    %v680 = vpop.permute.xlu0 %679
    %v681 = vadd.f32 %v678, %v680
    %682 = vrot.lane.b32.xlu0 %v681, 64
    %v683 = vpop.permute.xlu0 %682
    %v684 = vadd.f32 %v681, %v683
    %v685 = vmul.f32 %v684, 0.001953125
    %v686 = vmul.f32 %v685, %v685
    %v688 = vrot.slane %v686, 7
    %v690 = vsub.f32 %v685, %v688
    %v691 = vmax.f32 %v690, 0.0
    %v692 = vld [vmem:[%s5] sm:$0x1]
    %v693 = vadd.f32 %v691, 1e-05
    %v694 = vrsqrt.pop %v693
    %v697 = vunpack.c.l.s4 1966171168
    %v698 = vunpack.c.0.s8 %v697
    %v699 = vlaneseq
    %v700 = vshrl.u32 %v699, 7
    %v701 = vsub.s32 %v698, %v700
    %v702 = vrot.slane %v694, %v701
    %v703 = vcombine.high %v702, %v702
    %v705 = vunpack.c.l.s4 1966171168
    %v706 = vunpack.c.0.s8 %v705
    %v707 = vlaneseq
    %v708 = vshrl.u32 %v707, 7
    %v709 = vsub.s32 %v706, %v708
    %v710 = vrot.slane %v703, %v709
    %v712 = vmul.f32 %v692, %v710
    %v713 = vld [vmem:[%s6] sm:$0x1]
    %v714 = vmul.f32 %v685, %v712
    %v715 = vsub.f32 %v713, %v714
    %v717 = vlaneseq
    %v718 = vshrl.u32 %v717, 7
    %v719 = vsub.s32 0, %v718
    %v720 = vrot.slane %v712, %v719
    %v722 = vmul.f32 %v632, %v720
    %v723 = vmul.f32 %v637, %v720
    %v724 = vmul.f32 %v642, %v720
    %v725 = vmul.f32 %v647, %v720
    %v727 = vlaneseq
    %v728 = vshrl.u32 %v727, 7
    %v729 = vsub.s32 0, %v728
    %v730 = vrot.slane %v715, %v729
    %v732 = vadd.f32 %v722, %v730
    %v733 = vadd.f32 %v723, %v730
    %v734 = vadd.f32 %v724, %v730
    %v735 = vadd.f32 %v725, %v730
    %v736 = vmax.f32 %v732, 0.0
    %v737 = vmax.f32 %v733, 0.0
    %v738 = vmax.f32 %v734, 0.0
    %v739 = vmax.f32 %v735, 0.0
    %740 = vst [vmem:[#allocation8] sm:$0xff] %v736
    %741 = vst [vmem:[#allocation8 + $0x8] sm:$0xff] %v737
    %742 = vst [vmem:[#allocation8 + $0x10] sm:$0xff] %v738
    %743 = vst [vmem:[#allocation8 + $0x18] sm:$0xff] %v739
    // Predicated region
    $region42: #{tpu_custom_call.1} parent=1 // pred_check
      _
    $region43: #{tpu_custom_call.1} parent=1 // pred_check_branch
      %745 = sbr.rel (0) target = $region45
    $region44: #{tpu_custom_call.1} parent=1 // pred_region
      %s747 = ssub.s32 512, 512
      %748 = vsyncadd [#allocation4], %s747
      %s749 = sshll.u32 [#allocation8], 4
      %s750 = int_to_ptr.vmem [resolvable:$true] %s749
      %755 = dma.vmem_to_hbm [thread:$0]  %s750, 512, %s7, [#allocation4], 128, 128, 8
    $region45: #{tpu_custom_call.1} parent=1 // pred_fallthru
      _
    // Predicated region
    $region46: #{tpu_custom_call.1} parent=1 // pred_check
      _
    $region47: #{tpu_custom_call.1} parent=1 // pred_check_branch
      %757 = sbr.rel (0) target = $region49
    $region48: #{tpu_custom_call.1} parent=1 // pred_region
      %758 = dma.done [#allocation4], 512
    $region49: #{tpu_custom_call.1} parent=1 // pred_fallthru
      _
    %759 = vsyncpa [#allocation3], 1
    %760 = vsyncpa [#allocation6], 1
    %761 = vsyncpa [#allocation4], 1

</llo_original>
